<compile_context>
chip_gen: v7x
topology: tpu7x:2x2x1
jax: 0.10.0
libtpu: 0.0.40
codegen_flags: <defaults>
</compile_context>

<pallas_src>
import functools

import jax
import jax.numpy as jnp
from jax.experimental import pallas as pl
from jax.experimental.pallas import tpu as pltpu


def _round_up(n: int, m: int) -> int:
    return ((n + m - 1) // m) * m


def _make_mlp_kernel(n_layers: int, compute_dtype, tanh_dtype):
    """Kernel: Linear -> [Tanh -> (Dropout=identity) -> Linear]*n_layers -> Tanh -> Linear.

    refs = (x, w0, b0, w1, b1, ..., w_last, b_last, out)
    Weights arrive pre-transposed to (in, out), already cast to compute_dtype;
    biases stay f32. All matmuls accumulate in f32 on the MXU.
    """

    def act(h_f32):
        # tanh in tanh_dtype (bf16 -> packed EUP on v6e/v7x, ~2x throughput and
        # half the cast width; f32 for exactness / v5e), result fed to MXU in
        # compute_dtype.
        return jnp.tanh(h_f32.astype(tanh_dtype)).astype(compute_dtype)

    def kernel(*refs):
        x_ref = refs[0]
        out_ref = refs[-1]
        params = refs[1:-1]

        # Cast x in-kernel (no-op if the caller already passes compute_dtype);
        # avoids a wrapper-side HBM cast pass over x.
        x = x_ref[...].astype(compute_dtype)

        # input projection (f32 accumulate, f32 bias)
        h = jnp.dot(x, params[0][...],
                    preferred_element_type=jnp.float32) + params[1][...]

        # hidden blocks: tanh -> dropout (identity, eval mode) -> linear
        for i in range(n_layers):
            w, b = params[2 + 2 * i], params[3 + 2 * i]
            h = jnp.dot(act(h), w[...],
                        preferred_element_type=jnp.float32) + b[...]

        # final: tanh -> output linear
        w_out, b_out = params[-2], params[-1]
        h = jnp.dot(act(h), w_out[...],
                    preferred_element_type=jnp.float32) + b_out[...]

        out_ref[...] = h.astype(out_ref.dtype)

    return kernel


def plainnet_init_params(key, n_inputs, n_outputs, n_layers=1, n_units=100, std=0.1):
    """Matches PlainNet.init_network_weights: weights ~ Normal(0, std), biases = 0.
    Weights stored as (in, out) so the kernel does plain `x @ W + b`."""
    dims = [(n_inputs, n_units)] + [(n_units, n_units)] * n_layers + [(n_units, n_outputs)]
    params = []
    for (d_in, d_out) in dims:
        key, sub = jax.random.split(key)
        w = std * jax.random.normal(sub, (d_in, d_out), dtype=jnp.float32)
        b = jnp.zeros((1, d_out), dtype=jnp.float32)
        params += [w, b]
    return params


def plainnet_prepare_params(params, compute_dtype=jnp.bfloat16):
    """One-time parameter prep (call at init, NOT per forward):
      * pad every output (N) dim and the hidden/output K dims to multiples of
        128 (lane-dense, clean MXU tiling); padding is exact (zero rows/cols,
        zero bias) and padded output columns are sliced off after the kernel.
      * the FIRST layer's K (= n_inputs) is left unpadded so x is streamed at
        its natural width (no wasted HBM bandwidth on the input side).
      * weights cast to compute_dtype (bf16 by default); biases stay f32.
    """
    prepared = []
    n_linear = len(params) // 2
    for li in range(n_linear):
        w, b = params[2 * li], params[2 * li + 1]
        d_in, d_out = w.shape
        d_in_p = d_in if li == 0 else _round_up(d_in, 128)
        d_out_p = _round_up(d_out, 128)
        w_p = jnp.pad(w, ((0, d_in_p - d_in), (0, d_out_p - d_out))).astype(compute_dtype)
        b_p = jnp.pad(b.reshape(1, -1), ((0, 0), (0, d_out_p - d_out))).astype(jnp.float32)
        prepared += [w_p, b_p]
    return prepared


@functools.partial(
    jax.jit, static_argnames=("n_layers", "n_outputs", "tanh_dtype", "block_b")
)
def plainnet_forward(x, prepared_params, *, n_layers, n_outputs,
                     tanh_dtype=None, block_b=None):
    """Eval-mode forward pass of PlainNet as one fused Pallas kernel.

    x:               [B, n_inputs] (f32 or bf16)
    prepared_params: output of plainnet_prepare_params (weights (in,out) in the
                     compute dtype, biases (1,out) f32, 128-padded N dims).
    Returns [B, n_outputs] in the compute dtype (upcast outside if needed).
    """
    B, n_inputs = x.shape
    compute_dtype = prepared_params[0].dtype
    assert prepared_params[0].shape[0] == n_inputs, "x / first-weight K mismatch"
    n_out_pad = prepared_params[-1].shape[-1]
    n_units_pad = prepared_params[0].shape[-1]
    if tanh_dtype is None:
        tanh_dtype = compute_dtype

    # ---- batch tile: sublane-pack aligned, big tiles, >=2 steps when large ---
    pack = 16 if x.dtype == jnp.bfloat16 else 8
    if block_b is None:
        b_aligned = _round_up(B, pack)
        if b_aligned <= 256:
            # tiny batch: one block, per-step pipeline overhead (~0.35us) dominates
            block_b = b_aligned
        else:
            # large batch: 512-1024-row tiles reach ~85% of HBM roofline, but keep
            # at least 2 grid steps so both v7x TensorCores get work ("parallel").
            block_b = min(1024, _round_up(-(-b_aligned // 2), 256))
    B_pad = _round_up(B, block_b)

    x_p = x if B_pad == B else jnp.pad(x, ((0, B_pad - B), (0, 0)))

    kernel = _make_mlp_kernel(n_layers, compute_dtype, tanh_dtype)

    # x / out tiled over batch; every parameter loaded whole with a constant
    # index_map (DMA'd once, resident in VMEM across the grid).
    x_spec = pl.BlockSpec((block_b, n_inputs), lambda i: (i, 0))
    param_specs = [pl.BlockSpec(p.shape, lambda i: (0, 0)) for p in prepared_params]
    out_spec = pl.BlockSpec((block_b, n_out_pad), lambda i: (i, 0))

    # VMEM estimate (double-buffered x/out tiles + resident params + f32 acts);
    # only raise the scoped limit if we'd exceed the conservative v5e default.
    itemsize = jnp.dtype(compute_dtype).itemsize
    est = 2 * block_b * (n_inputs * x.dtype.itemsize + n_out_pad * itemsize)
    est += 2 * sum(int(p.size) * p.dtype.itemsize for p in prepared_params)
    est += 2 * block_b * n_units_pad * 4
    vmem_limit = min(int(est * 1.5), 100 * 1024 * 1024) if est > 12 * 1024 * 1024 else None

    out = pl.pallas_call(
        kernel,
        out_shape=jax.ShapeDtypeStruct((B_pad, n_out_pad), compute_dtype),
        grid_spec=pltpu.PrefetchScalarGridSpec(
            num_scalar_prefetch=0,
            grid=(B_pad // block_b,),
            in_specs=[x_spec] + param_specs,
            out_specs=out_spec,
        ),
        compiler_params=pltpu.CompilerParams(
            dimension_semantics=("parallel",),
            vmem_limit_bytes=vmem_limit,
        ),
    )(x_p, *prepared_params)

    return out[:B, :n_outputs]


def plainnet_reference(x, params, n_layers):
    """Pure-JAX reference (eval-mode dropout), f32."""
    h = x
    w0, b0 = params[0], params[1]
    h = h @ w0 + b0
    for i in range(n_layers):
        w, b = params[2 + 2 * i], params[3 + 2 * i]
        h = jnp.tanh(h) @ w + b
    w_out, b_out = params[-2], params[-1]
    h = jnp.tanh(h) @ w_out + b_out
    return h


if __name__ == "__main__":
    # Shapes matching the module defaults: x is [batch, n_inputs], n_units=100.
    batch, n_inputs, n_units, n_outputs, n_layers = 16, 32, 100, 32, 1

    key = jax.random.PRNGKey(0)
    key_x, key_p = jax.random.split(key)
    x = jax.random.normal(key_x, (batch, n_inputs), dtype=jnp.float32)
    params = plainnet_init_params(
        key_p, n_inputs, n_outputs, n_layers=n_layers, n_units=n_units, std=0.1
    )
    ref = plainnet_reference(x, params, n_layers)

    # f32 path (exact semantics)
    p_f32 = plainnet_prepare_params(params, compute_dtype=jnp.float32)
    out_f32 = jax.block_until_ready(
        plainnet_forward(x, p_f32, n_layers=n_layers, n_outputs=n_outputs)
    )
    assert out_f32.shape == (batch, n_outputs)
    assert jnp.allclose(out_f32, ref, atol=1e-5, rtol=1e-5), "f32 mismatch vs reference"

    # bf16 default path (v6e/v7x recommendation): bf16 MXU + bf16 tanh, f32 accumulate.
    # (On v5e, pass tanh_dtype=jnp.float32 or prepare with compute_dtype=jnp.float32.)
    p_bf16 = plainnet_prepare_params(params)  # default bf16 weights
    out_bf16 = jax.block_until_ready(
        plainnet_forward(x, p_bf16, n_layers=n_layers, n_outputs=n_outputs)
    )
    assert out_bf16.dtype == jnp.bfloat16
    assert jnp.allclose(out_bf16.astype(jnp.float32), ref, atol=3e-2, rtol=3e-2), \
        "bf16 mismatch vs reference"

    # non-divisible batch exercises the padding path (grid=(1,))
    x_odd = jax.random.normal(key_x, (13, n_inputs), dtype=jnp.float32)
    out_odd = jax.block_until_ready(
        plainnet_forward(x_odd, p_f32, n_layers=n_layers, n_outputs=n_outputs)
    )
    ref_odd = plainnet_reference(x_odd, params, n_layers)
    assert out_odd.shape == (13, n_outputs)
    assert jnp.allclose(out_odd, ref_odd, atol=1e-5, rtol=1e-5), "odd-batch mismatch"

    # large batch exercises the multi-step grid (>=2 tiles, megacore-friendly)
    x_big = jax.random.normal(key_x, (1536, n_inputs), dtype=jnp.float32)
    out_big = jax.block_until_ready(
        plainnet_forward(x_big, p_bf16, n_layers=n_layers, n_outputs=n_outputs)
    )
    ref_big = plainnet_reference(x_big, params, n_layers)
    assert out_big.shape == (1536, n_outputs)
    assert jnp.allclose(out_big.astype(jnp.float32), ref_big, atol=3e-2, rtol=3e-2), \
        "large-batch mismatch"

    print("KERNEL_OK")
</pallas_src>

<mosaic_0001>
module attributes {stable_mosaic.version = 11 : i64} {
  func.func @kernel(%arg0: i32, %arg1: memref<16x32xf32, #tpu.memory_space<vmem>>, %arg2: memref<32x128xf32, #tpu.memory_space<vmem>>, %arg3: memref<1x128xf32, #tpu.memory_space<vmem>>, %arg4: memref<128x128xf32, #tpu.memory_space<vmem>>, %arg5: memref<1x128xf32, #tpu.memory_space<vmem>>, %arg6: memref<128x128xf32, #tpu.memory_space<vmem>>, %arg7: memref<1x128xf32, #tpu.memory_space<vmem>>, %arg8: memref<16x128xf32, #tpu.memory_space<vmem>>) attributes {dimension_semantics = [#tpu.dimension_semantics<parallel>], iteration_bounds = array<i64: 1>, scalar_prefetch = 0 : i64, scratch_operands = 0 : i64, tpu.core_type = #tpu.core_type<tc>, window_params = [{transform_indices = @transform_0, window_bounds = array<i64: 16, 32>}, {pipeline_mode = #tpu.pipeline_mode<synchronous>, transform_indices = @transform_1, window_bounds = array<i64: 32, 128>}, {pipeline_mode = #tpu.pipeline_mode<synchronous>, transform_indices = @transform_2, window_bounds = array<i64: 1, 128>}, {pipeline_mode = #tpu.pipeline_mode<synchronous>, transform_indices = @transform_3, window_bounds = array<i64: 128, 128>}, {pipeline_mode = #tpu.pipeline_mode<synchronous>, transform_indices = @transform_4, window_bounds = array<i64: 1, 128>}, {pipeline_mode = #tpu.pipeline_mode<synchronous>, transform_indices = @transform_5, window_bounds = array<i64: 128, 128>}, {pipeline_mode = #tpu.pipeline_mode<synchronous>, transform_indices = @transform_6, window_bounds = array<i64: 1, 128>}, {transform_indices = @transform_7, window_bounds = array<i64: 16, 128>}]} {
    %c0 = arith.constant 0 : index
    %c0_0 = arith.constant 0 : index
    %0 = vector.load %arg1[%c0, %c0_0] : memref<16x32xf32, #tpu.memory_space<vmem>>, vector<16x32xf32>
    %c0_1 = arith.constant 0 : index
    %c0_2 = arith.constant 0 : index
    %1 = vector.load %arg2[%c0_1, %c0_2] : memref<32x128xf32, #tpu.memory_space<vmem>>, vector<32x128xf32>
    %cst = arith.constant dense<0.000000e+00> : vector<16x128xf32>
    %2 = tpu.matmul %0, %1, %cst {dimension_numbers = #tpu.dot_dimension_numbers<[1], [0], [0], [1], [0, 0, 1, 1], [], []>} : vector<16x32xf32>, vector<32x128xf32>, vector<16x128xf32> -> vector<16x128xf32>
    %c0_3 = arith.constant 0 : index
    %c0_4 = arith.constant 0 : index
    %3 = vector.load %arg3[%c0_3, %c0_4] : memref<1x128xf32, #tpu.memory_space<vmem>>, vector<1x128xf32>
    %4 = vector.broadcast %3 : vector<1x128xf32> to vector<16x128xf32>
    %5 = arith.addf %2, %4 : vector<16x128xf32>
    %6 = math.tanh %5 : vector<16x128xf32>
    %c0_5 = arith.constant 0 : index
    %c0_6 = arith.constant 0 : index
    %7 = vector.load %arg4[%c0_5, %c0_6] : memref<128x128xf32, #tpu.memory_space<vmem>>, vector<128x128xf32>
    %cst_7 = arith.constant dense<0.000000e+00> : vector<16x128xf32>
    %8 = tpu.matmul %6, %7, %cst_7 {dimension_numbers = #tpu.dot_dimension_numbers<[1], [0], [0], [1], [0, 0, 1, 1], [], []>} : vector<16x128xf32>, vector<128x128xf32>, vector<16x128xf32> -> vector<16x128xf32>
    %c0_8 = arith.constant 0 : index
    %c0_9 = arith.constant 0 : index
    %9 = vector.load %arg5[%c0_8, %c0_9] : memref<1x128xf32, #tpu.memory_space<vmem>>, vector<1x128xf32>
    %10 = vector.broadcast %9 : vector<1x128xf32> to vector<16x128xf32>
    %11 = arith.addf %8, %10 : vector<16x128xf32>
    %12 = math.tanh %11 : vector<16x128xf32>
    %c0_10 = arith.constant 0 : index
    %c0_11 = arith.constant 0 : index
    %13 = vector.load %arg6[%c0_10, %c0_11] : memref<128x128xf32, #tpu.memory_space<vmem>>, vector<128x128xf32>
    %cst_12 = arith.constant dense<0.000000e+00> : vector<16x128xf32>
    %14 = tpu.matmul %12, %13, %cst_12 {dimension_numbers = #tpu.dot_dimension_numbers<[1], [0], [0], [1], [0, 0, 1, 1], [], []>} : vector<16x128xf32>, vector<128x128xf32>, vector<16x128xf32> -> vector<16x128xf32>
    %c0_13 = arith.constant 0 : index
    %c0_14 = arith.constant 0 : index
    %15 = vector.load %arg7[%c0_13, %c0_14] : memref<1x128xf32, #tpu.memory_space<vmem>>, vector<1x128xf32>
    %16 = vector.broadcast %15 : vector<1x128xf32> to vector<16x128xf32>
    %17 = arith.addf %14, %16 : vector<16x128xf32>
    %c0_15 = arith.constant 0 : index
    %c0_16 = arith.constant 0 : index
    %18 = vector.load %arg8[%c0_15, %c0_16] : memref<16x128xf32, #tpu.memory_space<vmem>>, vector<16x128xf32>
    tpu.vector_store %arg8[%c0_15, %c0_16], %17 {strides = array<i32>} : memref<16x128xf32, #tpu.memory_space<vmem>>, vector<16x128xf32>,
    return
  }
  func.func @transform_0(%arg0: i32) -> (i32, i32) {
    %c0_i32 = arith.constant 0 : i32
    %c0_i32_0 = arith.constant 0 : i32
    return %arg0, %c0_i32 : i32, i32
  }
  func.func @transform_1(%arg0: i32) -> (i32, i32) {
    %c0_i32 = arith.constant 0 : i32
    %c0_i32_0 = arith.constant 0 : i32
    %c0_i32_1 = arith.constant 0 : i32
    return %c0_i32, %c0_i32_0 : i32, i32
  }
  func.func @transform_2(%arg0: i32) -> (i32, i32) {
    %c0_i32 = arith.constant 0 : i32
    %c0_i32_0 = arith.constant 0 : i32
    %c0_i32_1 = arith.constant 0 : i32
    return %c0_i32, %c0_i32_0 : i32, i32
  }
  func.func @transform_3(%arg0: i32) -> (i32, i32) {
    %c0_i32 = arith.constant 0 : i32
    %c0_i32_0 = arith.constant 0 : i32
    %c0_i32_1 = arith.constant 0 : i32
    return %c0_i32, %c0_i32_0 : i32, i32
  }
  func.func @transform_4(%arg0: i32) -> (i32, i32) {
    %c0_i32 = arith.constant 0 : i32
    %c0_i32_0 = arith.constant 0 : i32
    %c0_i32_1 = arith.constant 0 : i32
    return %c0_i32, %c0_i32_0 : i32, i32
  }
  func.func @transform_5(%arg0: i32) -> (i32, i32) {
    %c0_i32 = arith.constant 0 : i32
    %c0_i32_0 = arith.constant 0 : i32
    %c0_i32_1 = arith.constant 0 : i32
    return %c0_i32, %c0_i32_0 : i32, i32
  }
  func.func @transform_6(%arg0: i32) -> (i32, i32) {
    %c0_i32 = arith.constant 0 : i32
    %c0_i32_0 = arith.constant 0 : i32
    %c0_i32_1 = arith.constant 0 : i32
    return %c0_i32, %c0_i32_0 : i32, i32
  }
  func.func @transform_7(%arg0: i32) -> (i32, i32) {
    %c0_i32 = arith.constant 0 : i32
    %c0_i32_0 = arith.constant 0 : i32
    return %arg0, %c0_i32 : i32, i32
  }
}

</mosaic_0001>

<llo_original>
// kernel: plainnet_forward.1
$region0: #{plainnet_forward.1}
  #allocation0 [shape = 'u32[]', space=smem, size = 0x4, offset = 0x4, fixed_abs, tag = 'smem constant byte address 0x4 - core index']
  #allocation1 [shape = 'u32[144,128]{1,0:T(1,128)}', space=vmem, size = 0x12000, scoped, tag = 'internal scratch']
  %s0 = inlined_call_operand.hbm [shape: f32[16,32], index: 0, kind: input, shape index: {}]
  %s1 = inlined_call_operand.hbm [shape: f32[32,128], index: 1, kind: input, shape index: {}]
  %s2 = inlined_call_operand.vmem [shape: f32[1,128], index: 2, kind: input, shape index: {}]
  %s3 = inlined_call_operand.hbm [shape: f32[128,128], index: 3, kind: input, shape index: {}]
  %s4 = inlined_call_operand.vmem [shape: f32[1,128], index: 4, kind: input, shape index: {}]
  %s5 = inlined_call_operand.hbm [shape: f32[128,128], index: 5, kind: input, shape index: {}]
  %s6 = inlined_call_operand.vmem [shape: f32[1,128], index: 6, kind: input, shape index: {}]
  %s7 = inlined_call_operand.hbm [shape: f32[16,128], index: 7, kind: output, shape index: {}]
  %s8 = sld [smem:[#allocation0]]
  $region54: #{plainnet_forward.1} parent=0
    _
  %s10 = ssub.s32 1, %s8
  %s11 = scalar_select 0, %s10, %s8
  $region1: #{plainnet_forward.1} parent=0
    #allocation2 [shape = 'u8[8192]{0}', space=vmem, size = 0x2000, scoped, tag = 'input window, operand 0, single buffered']
    #allocation3 [shape = 's32[1]{0}', space=sflag, size = 0x4, scoped, tag = 'scoped memory for plainnet_forward.1']
    #allocation4 [shape = 's32[1]{0}', space=sflag, size = 0x4, scoped, tag = 'scoped memory for plainnet_forward.1']
    #allocation5 [shape = 'u8[16384]{0}', space=vmem, size = 0x4000, scoped, tag = 'input window, operand 1, single buffered']
    #allocation6 [shape = 's32[1]{0}', space=sflag, size = 0x4, scoped, tag = 'scoped memory for plainnet_forward.1']
    #allocation7 [shape = 'u8[65536]{0}', space=vmem, size = 0x10000, scoped, tag = 'input window, operand 3, single buffered']
    #allocation8 [shape = 'u8[65536]{0}', space=vmem, size = 0x10000, scoped, tag = 'input window, operand 5, single buffered']
    #allocation9 [shape = 's32[1]{0}', space=sflag, size = 0x4, scoped, tag = 'scoped memory for plainnet_forward.1']
    #allocation10 [shape = 'u8[8192]{0}', space=vmem, size = 0x2000, scoped, tag = 'output window, operand 0, single buffered']
    %12 = vsyncpa [#allocation3], 0
    %13 = vsyncpa [#allocation6], 0
    %14 = vsyncpa [#allocation9], 0
    %15 = vsyncpa [#allocation4], 0
    // Predicated region
    $region2: #{plainnet_forward.1} parent=1 // pred_check
      _
    $region3: #{plainnet_forward.1} parent=1 // pred_check_branch
      %17 = sbr.rel (0) target = $region5
    $region4: #{plainnet_forward.1} parent=1 // pred_region
      %s19 = ssub.s32 256, 256
      %20 = vsyncadd [#allocation3], %s19
      %s21 = sshll.u32 [#allocation2], 4
      %s22 = int_to_ptr.vmem [resolvable:$true] %s21
      %27 = dma.hbm_to_vmem [thread:$0]  %s0, 256, %s22, [#allocation3], 128, 128, 8
    $region5: #{plainnet_forward.1} parent=1 // pred_fallthru
      _
    // Predicated region
    $region6: #{plainnet_forward.1} parent=1 // pred_check
      _
    $region7: #{plainnet_forward.1} parent=1 // pred_check_branch
      %29 = sbr.rel (0) target = $region9
    $region8: #{plainnet_forward.1} parent=1 // pred_region
      %s31 = ssub.s32 512, 512
      %32 = vsyncadd [#allocation6], %s31
      %s33 = sshll.u32 [#allocation5], 4
      %s34 = int_to_ptr.vmem [resolvable:$true] %s33
      %39 = dma.hbm_to_vmem [thread:$0]  %s1, 512, %s34, [#allocation6], 128, 128, 8
    $region9: #{plainnet_forward.1} parent=1 // pred_fallthru
      _
    // Predicated region
    $region10: #{plainnet_forward.1} parent=1 // pred_check
      _
    $region11: #{plainnet_forward.1} parent=1 // pred_check_branch
      %41 = sbr.rel (0) target = $region13
    $region12: #{plainnet_forward.1} parent=1 // pred_region
      _
    $region13: #{plainnet_forward.1} parent=1 // pred_fallthru
      _
    // Predicated region
    $region14: #{plainnet_forward.1} parent=1 // pred_check
      _
    $region15: #{plainnet_forward.1} parent=1 // pred_check_branch
      %43 = sbr.rel (0) target = $region17
    $region16: #{plainnet_forward.1} parent=1 // pred_region
      %s45 = ssub.s32 2048, 2048
      %46 = vsyncadd [#allocation6], %s45
      %s47 = sshll.u32 [#allocation7], 4
      %s48 = int_to_ptr.vmem [resolvable:$true] %s47
      %53 = dma.hbm_to_vmem [thread:$0]  %s3, 2048, %s48, [#allocation6], 128, 128, 8
    $region17: #{plainnet_forward.1} parent=1 // pred_fallthru
      _
    // Predicated region
    $region18: #{plainnet_forward.1} parent=1 // pred_check
      _
    $region19: #{plainnet_forward.1} parent=1 // pred_check_branch
      %55 = sbr.rel (0) target = $region21
    $region20: #{plainnet_forward.1} parent=1 // pred_region
      _
    $region21: #{plainnet_forward.1} parent=1 // pred_fallthru
      _
    // Predicated region
    $region22: #{plainnet_forward.1} parent=1 // pred_check
      _
    $region23: #{plainnet_forward.1} parent=1 // pred_check_branch
      %57 = sbr.rel (0) target = $region25
    $region24: #{plainnet_forward.1} parent=1 // pred_region
      %s59 = ssub.s32 2048, 2048
      %60 = vsyncadd [#allocation9], %s59
      %s61 = sshll.u32 [#allocation8], 4
      %s62 = int_to_ptr.vmem [resolvable:$true] %s61
      %67 = dma.hbm_to_vmem [thread:$0]  %s5, 2048, %s62, [#allocation9], 128, 128, 8
    $region25: #{plainnet_forward.1} parent=1 // pred_fallthru
      _
    // Predicated region
    $region26: #{plainnet_forward.1} parent=1 // pred_check
      _
    $region27: #{plainnet_forward.1} parent=1 // pred_check_branch
      %69 = sbr.rel (0) target = $region29
    $region28: #{plainnet_forward.1} parent=1 // pred_region
      _
    $region29: #{plainnet_forward.1} parent=1 // pred_fallthru
      _
    // Predicated region
    $region30: #{plainnet_forward.1} parent=1 // pred_check
      _
    $region31: #{plainnet_forward.1} parent=1 // pred_check_branch
      %71 = sbr.rel (0) target = $region33
    $region32: #{plainnet_forward.1} parent=1 // pred_region
      %72 = dma.done [#allocation3], 256
    $region33: #{plainnet_forward.1} parent=1 // pred_fallthru
      _
    // Predicated region
    $region34: #{plainnet_forward.1} parent=1 // pred_check
      _
    $region35: #{plainnet_forward.1} parent=1 // pred_check_branch
      %74 = sbr.rel (0) target = $region37
    $region36: #{plainnet_forward.1} parent=1 // pred_region
      %75 = dma.done [#allocation6], 512
    $region37: #{plainnet_forward.1} parent=1 // pred_fallthru
      _
    // Predicated region
    $region38: #{plainnet_forward.1} parent=1 // pred_check
      _
    $region39: #{plainnet_forward.1} parent=1 // pred_check_branch
      %77 = sbr.rel (0) target = $region41
    $region40: #{plainnet_forward.1} parent=1 // pred_region
      %78 = dma.done [#allocation6], 2048
    $region41: #{plainnet_forward.1} parent=1 // pred_fallthru
      _
    // Predicated region
    $region42: #{plainnet_forward.1} parent=1 // pred_check
      _
    $region43: #{plainnet_forward.1} parent=1 // pred_check_branch
      %80 = sbr.rel (0) target = $region45
    $region44: #{plainnet_forward.1} parent=1 // pred_region
      %81 = dma.done [#allocation9], 2048
    $region45: #{plainnet_forward.1} parent=1 // pred_fallthru
      _
    %v82 = vld [vmem:[#allocation2] sm:$0xff]
    %v83 = vld [vmem:[#allocation2 + $0x8] sm:$0xff]
    %v84 = vld [vmem:[#allocation5] sm:$0xff]
    %v85 = vld [vmem:[#allocation5 + $0x8] sm:$0xff]
    %v86 = vld [vmem:[#allocation5 + $0x10] sm:$0xff]
    %v87 = vld [vmem:[#allocation5 + $0x18] sm:$0xff]
    %v88 = vld [vmem:[%s2] sm:$0x1]
    %v90 = vlaneseq
    %v91 = vshrl.u32 %v90, 7
    %v92 = vsub.s32 0, %v91
    %v93 = vrot.slane %v88, %v92
    %vm95 = vcmask 261120
    %v97 = vsel %vm95, %v82, 0
    %v100 = vsel %vm95, %v83, 0
    %102 = vmatprep.subr.mxu0 0.0
    %103 = vmatpush1.msra.mxu0 %v84
    %104 = vmatprep.subr.mxu0 0.0
    %105 = vmatpush1.msra.mxu0 %v85
    %106 = vmatprep.subr.mxu0 0.0
    %107 = vmatpush1.msra.mxu0 %v86
    %108 = vmatprep.subr.mxu0 0.0
    %109 = vmatpush1.msra.mxu0 %v87
    %110 = vmatprep.subr.mxu0 0.0
    %111 = vmatpush1.msra.mxu0 0.0
    %112 = vmatprep.subr.mxu0 0.0
    %113 = vmatpush1.msra.mxu0 0.0
    %114 = vmatprep.subr.mxu0 0.0
    %115 = vmatpush1.msra.mxu0 0.0
    %116 = vmatprep.subr.mxu0 0.0
    %117 = vmatpush1.msra.mxu0 0.0
    %118 = vmatprep.subr.mxu0 0.0
    %119 = vmatpush1.msra.mxu0 0.0
    %120 = vmatprep.subr.mxu0 0.0
    %121 = vmatpush1.msra.mxu0 0.0
    %122 = vmatprep.subr.mxu0 0.0
    %123 = vmatpush1.msra.mxu0 0.0
    %124 = vmatprep.subr.mxu0 0.0
    %125 = vmatpush1.msra.mxu0 0.0
    %126 = vmatprep.subr.mxu0 0.0
    %127 = vmatpush1.msra.mxu0 0.0
    %128 = vmatprep.subr.mxu0 0.0
    %129 = vmatpush1.msra.mxu0 0.0
    %130 = vmatprep.subr.mxu0 0.0
    %131 = vmatpush1.msra.mxu0 0.0
    %132 = vmatprep.subr.mxu0 0.0
    %133 = vmatpush1.msra.mxu0 0.0
    %134 = vmatprep.subr.mxu0 0.0
    %135 = vmatpush1.msra.mxu0 0.0
    %136 = vmatprep.subr.mxu0 0.0
    %137 = vmatpush1.msra.mxu0 0.0
    %138 = vmatprep.subr.mxu0 0.0
    %139 = vmatpush1.msra.mxu0 0.0
    %140 = vmatprep.subr.mxu0 0.0
    %141 = vmatpush1.msra.mxu0 0.0
    %142 = vmatprep.subr.mxu0 0.0
    %143 = vmatpush1.msra.mxu0 0.0
    %144 = vmatprep.subr.mxu0 0.0
    %145 = vmatpush1.msra.mxu0 0.0
    %146 = vmatprep.subr.mxu0 0.0
    %147 = vmatpush1.msra.mxu0 0.0
    %148 = vmatprep.subr.mxu0 0.0
    %149 = vmatpush1.msra.mxu0 0.0
    %150 = vmatprep.subr.mxu0 0.0
    %151 = vmatpush1.msra.mxu0 0.0
    %152 = vmatprep.subr.mxu0 0.0
    %153 = vmatpush1.msra.mxu0 0.0
    %154 = vmatprep.subr.mxu0 0.0
    %155 = vmatpush1.msra.mxu0 0.0
    %156 = vmatprep.subr.mxu0 0.0
    %157 = vmatpush1.msra.mxu0 0.0
    %158 = vmatprep.subr.mxu0 0.0
    %159 = vmatpush1.msra.mxu0 0.0
    %160 = vmatprep.subr.mxu0 0.0
    %161 = vmatpush1.msra.mxu0 0.0
    %162 = vmatprep.subr.mxu0 0.0
    %163 = vmatpush1.msra.mxu0 0.0
    %164 = vmatprep.subr.mxu0 0.0
    %165 = vmatpush1.msra.mxu0 0.0
    %166 = vmatprep.mubr.f32.mxu0 0.0
    %167 = vmatmul.mubr.f32.gmra.mrb[0].mxu0 %v97
    %v168 = vpop.f32.mrb[0].mxu0
    %v169 = vadd.f32 %v93, %v168
    %v170 = vpop.f32.mrb[0].mxu0
    %171 = vmatprep.mubr.f32.mxu0 0.0
    %172 = vmatmul.mubr.f32.gmra.mrb[0].mxu0 %v100
    %v173 = vpop.f32.mrb[0].mxu0
    %v174 = vadd.f32 %v93, %v173
    %v175 = vpop.f32.mrb[0].mxu0
    %176 = vdwg.mxu0
    %v177 = vtanh.pop %v169
    %v178 = vtanh.pop %v174
    %v179 = vld [vmem:[#allocation7] sm:$0xff]
    %v180 = vld [vmem:[#allocation7 + $0x8] sm:$0xff]
    %v181 = vld [vmem:[#allocation7 + $0x10] sm:$0xff]
    %v182 = vld [vmem:[#allocation7 + $0x18] sm:$0xff]
    %v183 = vld [vmem:[#allocation7 + $0x20] sm:$0xff]
    %v184 = vld [vmem:[#allocation7 + $0x28] sm:$0xff]
    %v185 = vld [vmem:[#allocation7 + $0x30] sm:$0xff]
    %v186 = vld [vmem:[#allocation7 + $0x38] sm:$0xff]
    %v187 = vld [vmem:[#allocation7 + $0x40] sm:$0xff]
    %v188 = vld [vmem:[#allocation7 + $0x48] sm:$0xff]
    %v189 = vld [vmem:[#allocation7 + $0x50] sm:$0xff]
    %v190 = vld [vmem:[#allocation7 + $0x58] sm:$0xff]
    %v191 = vld [vmem:[#allocation7 + $0x60] sm:$0xff]
    %v192 = vld [vmem:[#allocation7 + $0x68] sm:$0xff]
    %v193 = vld [vmem:[#allocation7 + $0x70] sm:$0xff]
    %v194 = vld [vmem:[#allocation7 + $0x78] sm:$0xff]
    %v195 = vld [vmem:[%s4] sm:$0x1]
    %v197 = vlaneseq
    %v198 = vshrl.u32 %v197, 7
    %v199 = vsub.s32 0, %v198
    %v200 = vrot.slane %v195, %v199
    %202 = vmatprep.subr.mxu0 0.0
    %203 = vmatpush1.msra.mxu0 %v179
    %204 = vmatprep.subr.mxu0 0.0
    %205 = vmatpush1.msra.mxu0 %v180
    %206 = vmatprep.subr.mxu0 0.0
    %207 = vmatpush1.msra.mxu0 %v181
    %208 = vmatprep.subr.mxu0 0.0
    %209 = vmatpush1.msra.mxu0 %v182
    %210 = vmatprep.subr.mxu0 0.0
    %211 = vmatpush1.msra.mxu0 %v183
    %212 = vmatprep.subr.mxu0 0.0
    %213 = vmatpush1.msra.mxu0 %v184
    %214 = vmatprep.subr.mxu0 0.0
    %215 = vmatpush1.msra.mxu0 %v185
    %216 = vmatprep.subr.mxu0 0.0
    %217 = vmatpush1.msra.mxu0 %v186
    %218 = vmatprep.subr.mxu0 0.0
    %219 = vmatpush1.msra.mxu0 %v187
    %220 = vmatprep.subr.mxu0 0.0
    %221 = vmatpush1.msra.mxu0 %v188
    %222 = vmatprep.subr.mxu0 0.0
    %223 = vmatpush1.msra.mxu0 %v189
    %224 = vmatprep.subr.mxu0 0.0
    %225 = vmatpush1.msra.mxu0 %v190
    %226 = vmatprep.subr.mxu0 0.0
    %227 = vmatpush1.msra.mxu0 %v191
    %228 = vmatprep.subr.mxu0 0.0
    %229 = vmatpush1.msra.mxu0 %v192
    %230 = vmatprep.subr.mxu0 0.0
    %231 = vmatpush1.msra.mxu0 %v193
    %232 = vmatprep.subr.mxu0 0.0
    %233 = vmatpush1.msra.mxu0 %v194
    %234 = vmatprep.subr.mxu0 0.0
    %235 = vmatpush1.msra.mxu0 0.0
    %236 = vmatprep.subr.mxu0 0.0
    %237 = vmatpush1.msra.mxu0 0.0
    %238 = vmatprep.subr.mxu0 0.0
    %239 = vmatpush1.msra.mxu0 0.0
    %240 = vmatprep.subr.mxu0 0.0
    %241 = vmatpush1.msra.mxu0 0.0
    %242 = vmatprep.subr.mxu0 0.0
    %243 = vmatpush1.msra.mxu0 0.0
    %244 = vmatprep.subr.mxu0 0.0
    %245 = vmatpush1.msra.mxu0 0.0
    %246 = vmatprep.subr.mxu0 0.0
    %247 = vmatpush1.msra.mxu0 0.0
    %248 = vmatprep.subr.mxu0 0.0
    %249 = vmatpush1.msra.mxu0 0.0
    %250 = vmatprep.subr.mxu0 0.0
    %251 = vmatpush1.msra.mxu0 0.0
    %252 = vmatprep.subr.mxu0 0.0
    %253 = vmatpush1.msra.mxu0 0.0
    %254 = vmatprep.subr.mxu0 0.0
    %255 = vmatpush1.msra.mxu0 0.0
    %256 = vmatprep.subr.mxu0 0.0
    %257 = vmatpush1.msra.mxu0 0.0
    %258 = vmatprep.subr.mxu0 0.0
    %259 = vmatpush1.msra.mxu0 0.0
    %260 = vmatprep.subr.mxu0 0.0
    %261 = vmatpush1.msra.mxu0 0.0
    %262 = vmatprep.subr.mxu0 0.0
    %263 = vmatpush1.msra.mxu0 0.0
    %264 = vmatprep.subr.mxu0 0.0
    %265 = vmatpush1.msra.mxu0 0.0
    %266 = vmatprep.mubr.f32.mxu0 0.0
    %267 = vmatmul.mubr.f32.gmra.mrb[0].mxu0 %v177
    %v268 = vpop.f32.mrb[0].mxu0
    %v269 = vadd.f32 %v200, %v268
    %v270 = vpop.f32.mrb[0].mxu0
    %271 = vmatprep.mubr.f32.mxu0 0.0
    %272 = vmatmul.mubr.f32.gmra.mrb[0].mxu0 %v178
    %v273 = vpop.f32.mrb[0].mxu0
    %v274 = vadd.f32 %v200, %v273
    %v275 = vpop.f32.mrb[0].mxu0
    %276 = vdwg.mxu0
    %v277 = vtanh.pop %v269
    %v278 = vtanh.pop %v274
    %v279 = vld [vmem:[#allocation8] sm:$0xff]
    %v280 = vld [vmem:[#allocation8 + $0x8] sm:$0xff]
    %v281 = vld [vmem:[#allocation8 + $0x10] sm:$0xff]
    %v282 = vld [vmem:[#allocation8 + $0x18] sm:$0xff]
    %v283 = vld [vmem:[#allocation8 + $0x20] sm:$0xff]
    %v284 = vld [vmem:[#allocation8 + $0x28] sm:$0xff]
    %v285 = vld [vmem:[#allocation8 + $0x30] sm:$0xff]
    %v286 = vld [vmem:[#allocation8 + $0x38] sm:$0xff]
    %v287 = vld [vmem:[#allocation8 + $0x40] sm:$0xff]
    %v288 = vld [vmem:[#allocation8 + $0x48] sm:$0xff]
    %v289 = vld [vmem:[#allocation8 + $0x50] sm:$0xff]
    %v290 = vld [vmem:[#allocation8 + $0x58] sm:$0xff]
    %v291 = vld [vmem:[#allocation8 + $0x60] sm:$0xff]
    %v292 = vld [vmem:[#allocation8 + $0x68] sm:$0xff]
    %v293 = vld [vmem:[#allocation8 + $0x70] sm:$0xff]
    %v294 = vld [vmem:[#allocation8 + $0x78] sm:$0xff]
    %v295 = vld [vmem:[%s6] sm:$0x1]
    %v297 = vlaneseq
    %v298 = vshrl.u32 %v297, 7
    %v299 = vsub.s32 0, %v298
    %v300 = vrot.slane %v295, %v299
    %302 = vmatprep.subr.mxu0 0.0
    %303 = vmatpush1.msra.mxu0 %v279
    %304 = vmatprep.subr.mxu0 0.0
    %305 = vmatpush1.msra.mxu0 %v280
    %306 = vmatprep.subr.mxu0 0.0
    %307 = vmatpush1.msra.mxu0 %v281
    %308 = vmatprep.subr.mxu0 0.0
    %309 = vmatpush1.msra.mxu0 %v282
    %310 = vmatprep.subr.mxu0 0.0
    %311 = vmatpush1.msra.mxu0 %v283
    %312 = vmatprep.subr.mxu0 0.0
    %313 = vmatpush1.msra.mxu0 %v284
    %314 = vmatprep.subr.mxu0 0.0
    %315 = vmatpush1.msra.mxu0 %v285
    %316 = vmatprep.subr.mxu0 0.0
    %317 = vmatpush1.msra.mxu0 %v286
    %318 = vmatprep.subr.mxu0 0.0
    %319 = vmatpush1.msra.mxu0 %v287
    %320 = vmatprep.subr.mxu0 0.0
    %321 = vmatpush1.msra.mxu0 %v288
    %322 = vmatprep.subr.mxu0 0.0
    %323 = vmatpush1.msra.mxu0 %v289
    %324 = vmatprep.subr.mxu0 0.0
    %325 = vmatpush1.msra.mxu0 %v290
    %326 = vmatprep.subr.mxu0 0.0
    %327 = vmatpush1.msra.mxu0 %v291
    %328 = vmatprep.subr.mxu0 0.0
    %329 = vmatpush1.msra.mxu0 %v292
    %330 = vmatprep.subr.mxu0 0.0
    %331 = vmatpush1.msra.mxu0 %v293
    %332 = vmatprep.subr.mxu0 0.0
    %333 = vmatpush1.msra.mxu0 %v294
    %334 = vmatprep.subr.mxu0 0.0
    %335 = vmatpush1.msra.mxu0 0.0
    %336 = vmatprep.subr.mxu0 0.0
    %337 = vmatpush1.msra.mxu0 0.0
    %338 = vmatprep.subr.mxu0 0.0
    %339 = vmatpush1.msra.mxu0 0.0
    %340 = vmatprep.subr.mxu0 0.0
    %341 = vmatpush1.msra.mxu0 0.0
    %342 = vmatprep.subr.mxu0 0.0
    %343 = vmatpush1.msra.mxu0 0.0
    %344 = vmatprep.subr.mxu0 0.0
    %345 = vmatpush1.msra.mxu0 0.0
    %346 = vmatprep.subr.mxu0 0.0
    %347 = vmatpush1.msra.mxu0 0.0
    %348 = vmatprep.subr.mxu0 0.0
    %349 = vmatpush1.msra.mxu0 0.0
    %350 = vmatprep.subr.mxu0 0.0
    %351 = vmatpush1.msra.mxu0 0.0
    %352 = vmatprep.subr.mxu0 0.0
    %353 = vmatpush1.msra.mxu0 0.0
    %354 = vmatprep.subr.mxu0 0.0
    %355 = vmatpush1.msra.mxu0 0.0
    %356 = vmatprep.subr.mxu0 0.0
    %357 = vmatpush1.msra.mxu0 0.0
    %358 = vmatprep.subr.mxu0 0.0
    %359 = vmatpush1.msra.mxu0 0.0
    %360 = vmatprep.subr.mxu0 0.0
    %361 = vmatpush1.msra.mxu0 0.0
    %362 = vmatprep.subr.mxu0 0.0
    %363 = vmatpush1.msra.mxu0 0.0
    %364 = vmatprep.subr.mxu0 0.0
    %365 = vmatpush1.msra.mxu0 0.0
    %366 = vmatprep.mubr.f32.mxu0 0.0
    %367 = vmatmul.mubr.f32.gmra.mrb[0].mxu0 %v277
    %v368 = vpop.f32.mrb[0].mxu0
    %v369 = vadd.f32 %v300, %v368
    %v370 = vpop.f32.mrb[0].mxu0
    %371 = vmatprep.mubr.f32.mxu0 0.0
    %372 = vmatmul.mubr.f32.gmra.mrb[0].mxu0 %v278
    %v373 = vpop.f32.mrb[0].mxu0
    %v374 = vadd.f32 %v300, %v373
    %v375 = vpop.f32.mrb[0].mxu0
    %376 = vdwg.mxu0
    %377 = vst [vmem:[#allocation10] sm:$0xff] %v369
    %378 = vst [vmem:[#allocation10 + $0x8] sm:$0xff] %v374
    // Predicated region
    $region46: #{plainnet_forward.1} parent=1 // pred_check
      _
    $region47: #{plainnet_forward.1} parent=1 // pred_check_branch
      %380 = sbr.rel (0) target = $region49
    $region48: #{plainnet_forward.1} parent=1 // pred_region
      %s382 = ssub.s32 256, 256
      %383 = vsyncadd [#allocation4], %s382
      %s384 = sshll.u32 [#allocation10], 4
      %s385 = int_to_ptr.vmem [resolvable:$true] %s384
      %390 = dma.vmem_to_hbm [thread:$0]  %s385, 256, %s7, [#allocation4], 128, 128, 8
    $region49: #{plainnet_forward.1} parent=1 // pred_fallthru
      _
    // Predicated region
    $region50: #{plainnet_forward.1} parent=1 // pred_check
      _
    $region51: #{plainnet_forward.1} parent=1 // pred_check_branch
      %392 = sbr.rel (0) target = $region53
    $region52: #{plainnet_forward.1} parent=1 // pred_region
      %393 = dma.done [#allocation4], 256
    $region53: #{plainnet_forward.1} parent=1 // pred_fallthru
      _
    %394 = vsyncpa [#allocation3], 1
    %395 = vsyncpa [#allocation6], 1
    %396 = vsyncpa [#allocation9], 1
    %397 = vsyncpa [#allocation4], 1

</llo_original>
